<compile_context>
chip_gen: v7x
topology: tpu7x:2x2x1
jax: 0.10.0
libtpu: 0.0.40
codegen_flags: <defaults>
</compile_context>

<pallas_src>
import numpy as np
import jax
import jax.numpy as jnp
from jax.experimental import pallas as pl
from jax.experimental.pallas import tpu as pltpu


_VMEM_DESIGN_BUDGET = 40 << 20  # bytes of VMEM the tiling is allowed to target.


def _fft_linear_kernel(x_ref, w_ref, o_ref):
    # x_ref : (2N_pad, tile)    stacked [Re; Im] columns (lane-dense)
    # w_ref : (2N_pad, 2N_pad)  full trainable weight (VMEM-resident)
    # o_ref : (2N_pad, tile)    stacked [Re; Im] output columns
    o_ref[...] = jnp.dot(
        w_ref[...], x_ref[...], preferred_element_type=jnp.float32
    ).astype(o_ref.dtype)


def _max_lane_tile(two_np: int, in_itemsize: int) -> int:
    """Largest lane tile (multiple of 128, <= 1024) fitting the VMEM budget."""
    weight_bytes = 2 * two_np * two_np * in_itemsize          # worst case: 2 weight buffers
    per_lane = 2 * two_np * in_itemsize + 2 * two_np * 4      # 2x-buffered input + f32 output
    avail = _VMEM_DESIGN_BUDGET - weight_bytes
    if avail < per_lane * 128:
        # Weight alone ~fills the budget.
        # TODO(synk): for 2N >~ 2048 tile the weight over K / output rows with a
        # VMEM f32 accumulator instead of keeping it fully resident (v7x: 64 MiB VMEM).
        return 128
    return int(min(1024, (avail // per_lane) // 128 * 128))


def _lane_tiling(L: int, max_tile: int, prefer_split: bool):
    """Pick (L_pad, tile) with tile % 128 == 0 and L_pad % tile == 0."""
    max_t128 = max(1, min(1024, int(max_tile)) // 128)
    n128 = -(-L // 128)
    tile = None
    # Largest tile whose zero-lane padding overhead stays <= 1/16 of the data.
    for t128 in range(max_t128, 0, -1):
        lpad = -(-n128 // t128) * t128 * 128
        if (lpad - L) * 16 <= L:
            tile = t128 * 128
            break
    if tile is None:
        # Small / awkward L: minimise padded lanes, prefer the larger tile.
        best = None
        for t128 in range(max_t128, 0, -1):
            lpad = -(-n128 // t128) * t128 * 128
            key = (lpad, -t128)
            if best is None or key < best:
                best, tile = key, t128 * 128
    lpad = -(-L // tile) * tile
    # v7x megacore: if the whole lane axis fits one block (and there is no group
    # grid axis), split it in two when that costs no extra padding.
    if prefer_split and lpad == tile and n128 >= 2 and n128 % 2 == 0:
        tile = (n128 // 2) * 128
        lpad = 2 * tile
    return lpad, tile


def fft_linear_pallas(x_stacked: jax.Array, weight: jax.Array) -> jax.Array:
    """out[g, :, l] = weight @ x_stacked[g, :, l] for every group g / lane l.

    x_stacked : (G, 2N, L) real (f32 or bf16) — [Re; Im] stacked on the 2N axis.
    weight    : (2N, 2N)   real — the module's trainable linear weight.
    Returns   : (G, 2N, L) float32.
    """
    G, two_n, L = x_stacked.shape
    assert weight.shape == (two_n, two_n)
    in_dt = x_stacked.dtype
    itemsize = jnp.dtype(in_dt).itemsize

    # Sublane-align the stacked / contraction axis.
    two_np = -(-two_n // 8) * 8
    if two_np != two_n:
        x_stacked = jnp.pad(x_stacked, ((0, 0), (0, two_np - two_n), (0, 0)))
        weight = jnp.pad(weight, ((0, two_np - two_n), (0, two_np - two_n)))
    weight = weight.astype(in_dt)

    # Lane tiling: as large as the VMEM budget allows, padding waste <= 1/16.
    tile_cap = _max_lane_tile(two_np, itemsize)
    l_pad, tile = _lane_tiling(L, tile_cap, prefer_split=(G == 1))
    if l_pad != L:
        x_stacked = jnp.pad(x_stacked, ((0, 0), (0, 0), (0, l_pad - L)))

    grid = (G, l_pad // tile)
    data_spec = pl.BlockSpec((None, two_np, tile), lambda g, l: (g, 0, l))

    flops = 2 * two_np * two_np * G * l_pad
    bytes_accessed = (G * two_np * l_pad * (itemsize + 4)       # input + f32 output
                      + two_np * two_np * itemsize)             # weight
    footprint = (2 * two_np * tile * itemsize                   # double-buffered input
                 + 2 * two_np * tile * 4                        # double-buffered f32 output
                 + 2 * two_np * two_np * itemsize)              # weight (2 bufs worst case)
    vmem_limit = int(min(max(footprint + (8 << 20), 32 << 20), 100 << 20))

    def build(pin_weight: bool):
        if pin_weight:
            # Constant index map -> a single VMEM copy of the weight suffices.
            w_spec = pl.BlockSpec((two_np, two_np), lambda g, l: (0, 0),
                                  pipeline_mode=pl.Buffered(1))
        else:
            w_spec = pl.BlockSpec((two_np, two_np), lambda g, l: (0, 0))
        return pl.pallas_call(
            _fft_linear_kernel,
            out_shape=jax.ShapeDtypeStruct((G, two_np, l_pad), jnp.float32),
            grid_spec=pltpu.PrefetchScalarGridSpec(
                num_scalar_prefetch=0,
                grid=grid,
                in_specs=[data_spec, w_spec],
                out_specs=data_spec,
            ),
            compiler_params=pltpu.CompilerParams(
                dimension_semantics=("parallel", "parallel"),
                vmem_limit_bytes=vmem_limit,
            ),
            cost_estimate=pl.CostEstimate(
                flops=flops, transcendentals=0, bytes_accessed=bytes_accessed),
        )(x_stacked, weight)

    try:
        out = build(pin_weight=True)
    except Exception:   # pipeline_mode / Buffered(1) unsupported on this jax version
        out = build(pin_weight=False)

    if two_np != two_n or l_pad != L:
        out = out[:, :two_n, :L]
    return out


def make_weight(input_size: int) -> jnp.ndarray:
    """Deterministic init identical to the module's __init__ (use_fft_weights=True)."""
    N = input_size
    j, k = np.meshgrid(np.arange(N), np.arange(N), indexing="ij")
    dft = np.exp(-2j * np.pi * j * k / N).astype(np.complex64)
    top = np.concatenate((dft.real, -dft.imag), axis=1)
    bot = np.concatenate((dft.imag, dft.real), axis=1)
    return jnp.asarray(np.concatenate((top, bot), axis=0).astype(np.float32))


def second_fft_linear_layer(complex_adc: jax.Array, weight: jax.Array,
                            input_size: int, *,
                            compute_dtype=jnp.float32) -> jax.Array:
    """Forward pass of SecondFFTLinearLayer.

    complex_adc  : complex64 (B, C, N, W) with N == input_size.
    weight       : f32 (2N, 2N) linear weight (same layout as the PyTorch module).
    compute_dtype: jnp.float32 (exact) or jnp.bfloat16 (halves input/weight HBM
                   traffic, f32 accumulation — relax tolerances if used).
    Returns complex64 (B, C, N, W).
    """
    N = input_size
    B, C, H, W = complex_adc.shape
    assert H == N
    two_n = 2 * N

    if W % 128 == 0:
        # Native-layout path: lanes come straight from W; no transposes at all.
        x_st = jnp.concatenate(
            [jnp.real(complex_adc), jnp.imag(complex_adc)], axis=2
        ).reshape(B * C, two_n, W).astype(compute_dtype)
        out = fft_linear_pallas(x_st, weight)                    # (B*C, 2N, W) f32
        out_re = out[:, :N, :].reshape(B, C, N, W)
        out_im = out[:, N:, :].reshape(B, C, N, W)
        return jax.lax.complex(out_re, out_im)

    # Transpose path (small / unaligned W): flatten B*C*W into a dense lane axis.
    M = B * C * W
    x_t = jnp.transpose(complex_adc, (2, 0, 1, 3)).reshape(N, M)   # (N, M) complex
    x_st = jnp.concatenate(
        [jnp.real(x_t), jnp.imag(x_t)], axis=0
    ).astype(compute_dtype)                                        # (2N, M)
    out = fft_linear_pallas(x_st[None], weight)[0]                 # (2N, M) f32
    out_c = jax.lax.complex(out[:N], out[N:])                      # (N, M) complex64
    return jnp.transpose(out_c.reshape(N, B, C, W), (1, 2, 0, 3))  # (B, C, N, W)


def _reference(x: jax.Array, weight: jax.Array, N: int) -> jax.Array:
    """Plain-JAX replica of the PyTorch module's forward (no Pallas)."""
    B, C, _, W = x.shape
    x_perm = jnp.transpose(x, (0, 1, 3, 2)).reshape(-1, N)
    comb = jnp.concatenate((jnp.real(x_perm), jnp.imag(x_perm)), axis=-1)
    ref = comb @ weight.T
    ref_c = (ref[..., :N] + 1j * ref[..., N:]).astype(jnp.complex64)
    return jnp.transpose(ref_c.reshape(B, C, W, N), (0, 1, 3, 2))


if __name__ == "__main__":
    key = jax.random.PRNGKey(0)

    # Case 1: small W (< 128)  -> transpose (flattened-lane) path.  M = 128 lanes.
    # Case 2: W = 128          -> native-layout path (no wrapper transposes).
    for (B, C, N, W) in ((2, 4, 16, 16), (2, 3, 16, 128)):
        key, kr, ki, kw = jax.random.split(key, 4)
        real = jax.random.normal(kr, (B, C, N, W), dtype=jnp.float32)
        imag = jax.random.normal(ki, (B, C, N, W), dtype=jnp.float32)
        x = (real + 1j * imag).astype(jnp.complex64)

        # DFT init plus a small perturbation: the weight is trainable, so the
        # kernel must not rely on the DFT block symmetry.
        weight = make_weight(N) + 0.01 * jax.random.normal(
            kw, (2 * N, 2 * N), dtype=jnp.float32)

        y = second_fft_linear_layer(x, weight, N)
        y = jax.block_until_ready(y)

        assert y.shape == (B, C, N, W) and y.dtype == jnp.complex64
        np.testing.assert_allclose(np.asarray(y),
                                   np.asarray(_reference(x, weight, N)),
                                   rtol=1e-4, atol=1e-4)

    print("KERNEL_OK")
</pallas_src>

<mosaic_0001>
module attributes {stable_mosaic.version = 11 : i64} {
  func.func @_fft_linear_kernel(%arg0: i32, %arg1: i32, %arg2: memref<1x32x128xf32, #tpu.memory_space<vmem>>, %arg3: memref<32x32xf32, #tpu.memory_space<vmem>>, %arg4: memref<1x32x128xf32, #tpu.memory_space<vmem>>) attributes {dimension_semantics = [#tpu.dimension_semantics<parallel>, #tpu.dimension_semantics<parallel>], iteration_bounds = array<i64: 1, 1>, scalar_prefetch = 0 : i64, scratch_operands = 0 : i64, tpu.core_type = #tpu.core_type<tc>, window_params = [{transform_indices = @transform_0, window_bounds = array<i64: 1, 32, 128>}, {pipeline_mode = #tpu.pipeline_mode<synchronous>, transform_indices = @transform_1, window_bounds = array<i64: 32, 32>}, {transform_indices = @transform_2, window_bounds = array<i64: 1, 32, 128>}]} {
    %c0 = arith.constant 0 : index
    %c0_0 = arith.constant 0 : index
    %0 = vector.load %arg3[%c0, %c0_0] : memref<32x32xf32, #tpu.memory_space<vmem>>, vector<32x32xf32>
    %c0_1 = arith.constant 0 : index
    %c0_2 = arith.constant 0 : index
    %c0_3 = arith.constant 0 : index
    %1 = vector.load %arg2[%c0_1, %c0_2, %c0_3] : memref<1x32x128xf32, #tpu.memory_space<vmem>>, vector<1x32x128xf32>
    %2 = vector.shape_cast %1 : vector<1x32x128xf32> to vector<32x128xf32>
    %cst = arith.constant dense<0.000000e+00> : vector<32x128xf32>
    %3 = tpu.matmul %0, %2, %cst {dimension_numbers = #tpu.dot_dimension_numbers<[1], [0], [0], [1], [0, 0, 1, 1], [], []>} : vector<32x32xf32>, vector<32x128xf32>, vector<32x128xf32> -> vector<32x128xf32>
    %c0_4 = arith.constant 0 : index
    %c0_5 = arith.constant 0 : index
    %c0_6 = arith.constant 0 : index
    %4 = vector.load %arg4[%c0_4, %c0_5, %c0_6] : memref<1x32x128xf32, #tpu.memory_space<vmem>>, vector<1x32x128xf32>
    %5 = vector.shape_cast %4 : vector<1x32x128xf32> to vector<32x128xf32>
    %6 = vector.shape_cast %3 : vector<32x128xf32> to vector<1x32x128xf32>
    tpu.vector_store %arg4[%c0_4, %c0_5, %c0_6], %6 {strides = array<i32>} : memref<1x32x128xf32, #tpu.memory_space<vmem>>, vector<1x32x128xf32>,
    return
  }
  func.func @transform_0(%arg0: i32, %arg1: i32) -> (i32, i32, i32) {
    %c0_i32 = arith.constant 0 : i32
    %c0_i32_0 = arith.constant 0 : i32
    return %arg0, %c0_i32, %arg1 : i32, i32, i32
  }
  func.func @transform_1(%arg0: i32, %arg1: i32) -> (i32, i32) {
    %c0_i32 = arith.constant 0 : i32
    %c0_i32_0 = arith.constant 0 : i32
    %c0_i32_1 = arith.constant 0 : i32
    return %c0_i32, %c0_i32_0 : i32, i32
  }
  func.func @transform_2(%arg0: i32, %arg1: i32) -> (i32, i32, i32) {
    %c0_i32 = arith.constant 0 : i32
    %c0_i32_0 = arith.constant 0 : i32
    return %arg0, %c0_i32, %arg1 : i32, i32, i32
  }
}

module attributes {stable_mosaic.version = 11 : i64} {
  func.func @_fft_linear_kernel(%arg0: i32, %arg1: i32, %arg2: memref<1x32x128xf32, #tpu.memory_space<vmem>>, %arg3: memref<32x32xf32, #tpu.memory_space<vmem>>, %arg4: memref<1x32x128xf32, #tpu.memory_space<vmem>>) attributes {dimension_semantics = [#tpu.dimension_semantics<parallel>, #tpu.dimension_semantics<parallel>], iteration_bounds = array<i64: 1, 1>, scalar_prefetch = 0 : i64, scratch_operands = 0 : i64, tpu.core_type = #tpu.core_type<tc>, window_params = [{transform_indices = @transform_0, window_bounds = array<i64: 1, 32, 128>}, {pipeline_mode = #tpu.pipeline_mode<synchronous>, transform_indices = @transform_1, window_bounds = array<i64: 32, 32>}, {transform_indices = @transform_2, window_bounds = array<i64: 1, 32, 128>}]} {
    %c0 = arith.constant 0 : index
    %c0_0 = arith.constant 0 : index
    %0 = vector.load %arg3[%c0, %c0_0] : memref<32x32xf32, #tpu.memory_space<vmem>>, vector<32x32xf32>
    %c0_1 = arith.constant 0 : index
    %c0_2 = arith.constant 0 : index
    %c0_3 = arith.constant 0 : index
    %1 = vector.load %arg2[%c0_1, %c0_2, %c0_3] : memref<1x32x128xf32, #tpu.memory_space<vmem>>, vector<1x32x128xf32>
    %2 = vector.shape_cast %1 : vector<1x32x128xf32> to vector<32x128xf32>
    %cst = arith.constant dense<0.000000e+00> : vector<32x128xf32>
    %3 = tpu.matmul %0, %2, %cst {dimension_numbers = #tpu.dot_dimension_numbers<[1], [0], [0], [1], [0, 0, 1, 1], [], []>} : vector<32x32xf32>, vector<32x128xf32>, vector<32x128xf32> -> vector<32x128xf32>
    %c0_4 = arith.constant 0 : index
    %c0_5 = arith.constant 0 : index
    %c0_6 = arith.constant 0 : index
    %4 = vector.load %arg4[%c0_4, %c0_5, %c0_6] : memref<1x32x128xf32, #tpu.memory_space<vmem>>, vector<1x32x128xf32>
    %5 = vector.shape_cast %4 : vector<1x32x128xf32> to vector<32x128xf32>
    %6 = vector.shape_cast %3 : vector<32x128xf32> to vector<1x32x128xf32>
    tpu.vector_store %arg4[%c0_4, %c0_5, %c0_6], %6 {strides = array<i32>} : memref<1x32x128xf32, #tpu.memory_space<vmem>>, vector<1x32x128xf32>,
    return
  }
  func.func @transform_0(%arg0: i32, %arg1: i32) -> (i32, i32, i32) {
    %c0_i32 = arith.constant 0 : i32
    %c0_i32_0 = arith.constant 0 : i32
    return %arg0, %c0_i32, %arg1 : i32, i32, i32
  }
  func.func @transform_1(%arg0: i32, %arg1: i32) -> (i32, i32) {
    %c0_i32 = arith.constant 0 : i32
    %c0_i32_0 = arith.constant 0 : i32
    %c0_i32_1 = arith.constant 0 : i32
    return %c0_i32, %c0_i32_0 : i32, i32
  }
  func.func @transform_2(%arg0: i32, %arg1: i32) -> (i32, i32, i32) {
    %c0_i32 = arith.constant 0 : i32
    %c0_i32_0 = arith.constant 0 : i32
    return %arg0, %c0_i32, %arg1 : i32, i32, i32
  }
}

</mosaic_0001>

<llo_original>
// kernel: tpu_custom_call.1
$region0: #{tpu_custom_call.1}
  #allocation0 [shape = 'u32[]', space=smem, size = 0x4, offset = 0x4, fixed_abs, tag = 'smem constant byte address 0x4 - core index']
  #allocation1 [shape = 'u32[144,128]{1,0:T(1,128)}', space=vmem, size = 0x12000, scoped, tag = 'internal scratch']
  %s0 = inlined_call_operand.hbm [shape: f32[1,32,128], index: 0, kind: input, shape index: {}]
  %s1 = inlined_call_operand.hbm [shape: f32[32,32], index: 1, kind: input, shape index: {}]
  %s2 = inlined_call_operand.hbm [shape: f32[1,32,128], index: 2, kind: output, shape index: {}]
  %s3 = sld [smem:[#allocation0]]
  $region26: #{tpu_custom_call.1} parent=0
    _
  %s5 = ssub.s32 1, %s3
  %s6 = scalar_select 0, %s5, %s3
  $region1: #{tpu_custom_call.1} parent=0
    #allocation2 [shape = 'u8[16384]{0}', space=vmem, size = 0x4000, scoped, tag = 'input window, operand 0, single buffered']
    #allocation3 [shape = 's32[1]{0}', space=sflag, size = 0x4, scoped, tag = 'scoped memory for tpu_custom_call.1']
    #allocation4 [shape = 's32[1]{0}', space=sflag, size = 0x4, scoped, tag = 'scoped memory for tpu_custom_call.1']
    #allocation5 [shape = 'u8[16384]{0}', space=vmem, size = 0x4000, scoped, tag = 'input window, operand 1, single buffered']
    #allocation6 [shape = 's32[1]{0}', space=sflag, size = 0x4, scoped, tag = 'scoped memory for tpu_custom_call.1']
    #allocation7 [shape = 'u8[16384]{0}', space=vmem, size = 0x4000, scoped, tag = 'output window, operand 0, single buffered']
    %7 = vsyncpa [#allocation3], 0
    %8 = vsyncpa [#allocation6], 0
    %9 = vsyncpa [#allocation4], 0
    // Predicated region
    $region2: #{tpu_custom_call.1} parent=1 // pred_check
      _
    $region3: #{tpu_custom_call.1} parent=1 // pred_check_branch
      %11 = sbr.rel (0) target = $region5
    $region4: #{tpu_custom_call.1} parent=1 // pred_region
      %s13 = ssub.s32 512, 512
      %14 = vsyncadd [#allocation3], %s13
      %s15 = sshll.u32 [#allocation2], 4
      %s16 = int_to_ptr.vmem [resolvable:$true] %s15
      %21 = dma.hbm_to_vmem [thread:$0]  %s0, 512, %s16, [#allocation3], 128, 128, 8
    $region5: #{tpu_custom_call.1} parent=1 // pred_fallthru
      _
    // Predicated region
    $region6: #{tpu_custom_call.1} parent=1 // pred_check
      _
    $region7: #{tpu_custom_call.1} parent=1 // pred_check_branch
      %23 = sbr.rel (0) target = $region9
    $region8: #{tpu_custom_call.1} parent=1 // pred_region
      %s25 = ssub.s32 512, 512
      %26 = vsyncadd [#allocation6], %s25
      %s27 = sshll.u32 [#allocation5], 4
      %s28 = int_to_ptr.vmem [resolvable:$true] %s27
      %33 = dma.hbm_to_vmem [thread:$0]  %s1, 512, %s28, [#allocation6], 128, 128, 8
    $region9: #{tpu_custom_call.1} parent=1 // pred_fallthru
      _
    // Predicated region
    $region10: #{tpu_custom_call.1} parent=1 // pred_check
      _
    $region11: #{tpu_custom_call.1} parent=1 // pred_check_branch
      %35 = sbr.rel (0) target = $region13
    $region12: #{tpu_custom_call.1} parent=1 // pred_region
      %36 = dma.done [#allocation3], 512
    $region13: #{tpu_custom_call.1} parent=1 // pred_fallthru
      _
    // Predicated region
    $region14: #{tpu_custom_call.1} parent=1 // pred_check
      _
    $region15: #{tpu_custom_call.1} parent=1 // pred_check_branch
      %38 = sbr.rel (0) target = $region17
    $region16: #{tpu_custom_call.1} parent=1 // pred_region
      %39 = dma.done [#allocation6], 512
    $region17: #{tpu_custom_call.1} parent=1 // pred_fallthru
      _
    %v40 = vld [vmem:[#allocation5] sm:$0xff]
    %v41 = vld [vmem:[#allocation5 + $0x8] sm:$0xff]
    %v42 = vld [vmem:[#allocation5 + $0x10] sm:$0xff]
    %v43 = vld [vmem:[#allocation5 + $0x18] sm:$0xff]
    %v44 = vld [vmem:[#allocation2] sm:$0xff]
    %v45 = vld [vmem:[#allocation2 + $0x8] sm:$0xff]
    %v46 = vld [vmem:[#allocation2 + $0x10] sm:$0xff]
    %v47 = vld [vmem:[#allocation2 + $0x18] sm:$0xff]
    %vm48 = vcmask 261120
    %v50 = vsel %vm48, %v40, 0
    %v53 = vsel %vm48, %v41, 0
    %v56 = vsel %vm48, %v42, 0
    %v59 = vsel %vm48, %v43, 0
    %61 = vmatprep.subr.mxu0 0.0
    %62 = vmatpush1.msra.mxu0 %v44
    %63 = vmatprep.subr.mxu0 0.0
    %64 = vmatpush1.msra.mxu0 %v45
    %65 = vmatprep.subr.mxu0 0.0
    %66 = vmatpush1.msra.mxu0 %v46
    %67 = vmatprep.subr.mxu0 0.0
    %68 = vmatpush1.msra.mxu0 %v47
    %69 = vmatprep.subr.mxu0 0.0
    %70 = vmatpush1.msra.mxu0 0.0
    %71 = vmatprep.subr.mxu0 0.0
    %72 = vmatpush1.msra.mxu0 0.0
    %73 = vmatprep.subr.mxu0 0.0
    %74 = vmatpush1.msra.mxu0 0.0
    %75 = vmatprep.subr.mxu0 0.0
    %76 = vmatpush1.msra.mxu0 0.0
    %77 = vmatprep.subr.mxu0 0.0
    %78 = vmatpush1.msra.mxu0 0.0
    %79 = vmatprep.subr.mxu0 0.0
    %80 = vmatpush1.msra.mxu0 0.0
    %81 = vmatprep.subr.mxu0 0.0
    %82 = vmatpush1.msra.mxu0 0.0
    %83 = vmatprep.subr.mxu0 0.0
    %84 = vmatpush1.msra.mxu0 0.0
    %85 = vmatprep.subr.mxu0 0.0
    %86 = vmatpush1.msra.mxu0 0.0
    %87 = vmatprep.subr.mxu0 0.0
    %88 = vmatpush1.msra.mxu0 0.0
    %89 = vmatprep.subr.mxu0 0.0
    %90 = vmatpush1.msra.mxu0 0.0
    %91 = vmatprep.subr.mxu0 0.0
    %92 = vmatpush1.msra.mxu0 0.0
    %93 = vmatprep.subr.mxu0 0.0
    %94 = vmatpush1.msra.mxu0 0.0
    %95 = vmatprep.subr.mxu0 0.0
    %96 = vmatpush1.msra.mxu0 0.0
    %97 = vmatprep.subr.mxu0 0.0
    %98 = vmatpush1.msra.mxu0 0.0
    %99 = vmatprep.subr.mxu0 0.0
    %100 = vmatpush1.msra.mxu0 0.0
    %101 = vmatprep.subr.mxu0 0.0
    %102 = vmatpush1.msra.mxu0 0.0
    %103 = vmatprep.subr.mxu0 0.0
    %104 = vmatpush1.msra.mxu0 0.0
    %105 = vmatprep.subr.mxu0 0.0
    %106 = vmatpush1.msra.mxu0 0.0
    %107 = vmatprep.subr.mxu0 0.0
    %108 = vmatpush1.msra.mxu0 0.0
    %109 = vmatprep.subr.mxu0 0.0
    %110 = vmatpush1.msra.mxu0 0.0
    %111 = vmatprep.subr.mxu0 0.0
    %112 = vmatpush1.msra.mxu0 0.0
    %113 = vmatprep.subr.mxu0 0.0
    %114 = vmatpush1.msra.mxu0 0.0
    %115 = vmatprep.subr.mxu0 0.0
    %116 = vmatpush1.msra.mxu0 0.0
    %117 = vmatprep.subr.mxu0 0.0
    %118 = vmatpush1.msra.mxu0 0.0
    %119 = vmatprep.subr.mxu0 0.0
    %120 = vmatpush1.msra.mxu0 0.0
    %121 = vmatprep.subr.mxu0 0.0
    %122 = vmatpush1.msra.mxu0 0.0
    %123 = vmatprep.subr.mxu0 0.0
    %124 = vmatpush1.msra.mxu0 0.0
    %125 = vmatprep.mubr.f32.mxu0 0.0
    %126 = vmatmul.mubr.f32.gmra.mrb[0].mxu0 %v50
    %v127 = vpop.f32.mrb[0].mxu0
    %v128 = vadd.f32 0.0, %v127
    %v129 = vpop.f32.mrb[0].mxu0
    %130 = vmatprep.mubr.f32.mxu0 0.0
    %131 = vmatmul.mubr.f32.gmra.mrb[0].mxu0 %v53
    %v132 = vpop.f32.mrb[0].mxu0
    %v133 = vadd.f32 0.0, %v132
    %v134 = vpop.f32.mrb[0].mxu0
    %135 = vmatprep.mubr.f32.mxu0 0.0
    %136 = vmatmul.mubr.f32.gmra.mrb[0].mxu0 %v56
    %v137 = vpop.f32.mrb[0].mxu0
    %v138 = vadd.f32 0.0, %v137
    %v139 = vpop.f32.mrb[0].mxu0
    %140 = vmatprep.mubr.f32.mxu0 0.0
    %141 = vmatmul.mubr.f32.gmra.mrb[0].mxu0 %v59
    %v142 = vpop.f32.mrb[0].mxu0
    %v143 = vadd.f32 0.0, %v142
    %v144 = vpop.f32.mrb[0].mxu0
    %145 = vdwg.mxu0
    %146 = vst [vmem:[#allocation7] sm:$0xff] %v128
    %147 = vst [vmem:[#allocation7 + $0x8] sm:$0xff] %v133
    %148 = vst [vmem:[#allocation7 + $0x10] sm:$0xff] %v138
    %149 = vst [vmem:[#allocation7 + $0x18] sm:$0xff] %v143
    // Predicated region
    $region18: #{tpu_custom_call.1} parent=1 // pred_check
      _
    $region19: #{tpu_custom_call.1} parent=1 // pred_check_branch
      %151 = sbr.rel (0) target = $region21
    $region20: #{tpu_custom_call.1} parent=1 // pred_region
      %s153 = ssub.s32 512, 512
      %154 = vsyncadd [#allocation4], %s153
      %s155 = sshll.u32 [#allocation7], 4
      %s156 = int_to_ptr.vmem [resolvable:$true] %s155
      %161 = dma.vmem_to_hbm [thread:$0]  %s156, 512, %s2, [#allocation4], 128, 128, 8
    $region21: #{tpu_custom_call.1} parent=1 // pred_fallthru
      _
    // Predicated region
    $region22: #{tpu_custom_call.1} parent=1 // pred_check
      _
    $region23: #{tpu_custom_call.1} parent=1 // pred_check_branch
      %163 = sbr.rel (0) target = $region25
    $region24: #{tpu_custom_call.1} parent=1 // pred_region
      %164 = dma.done [#allocation4], 512
    $region25: #{tpu_custom_call.1} parent=1 // pred_fallthru
      _
    %165 = vsyncpa [#allocation3], 1
    %166 = vsyncpa [#allocation6], 1
    %167 = vsyncpa [#allocation4], 1

// kernel: tpu_custom_call.1
$region0: #{tpu_custom_call.1}
  #allocation0 [shape = 'u32[]', space=smem, size = 0x4, offset = 0x4, fixed_abs, tag = 'smem constant byte address 0x4 - core index']
  #allocation1 [shape = 'u32[144,128]{1,0:T(1,128)}', space=vmem, size = 0x12000, scoped, tag = 'internal scratch']
  %s0 = inlined_call_operand.hbm [shape: f32[1,32,128], index: 0, kind: input, shape index: {}]
  %s1 = inlined_call_operand.hbm [shape: f32[32,32], index: 1, kind: input, shape index: {}]
  %s2 = inlined_call_operand.hbm [shape: f32[1,32,128], index: 2, kind: output, shape index: {}]
  %s3 = sld [smem:[#allocation0]]
  $region26: #{tpu_custom_call.1} parent=0
    _
  %s5 = ssub.s32 1, %s3
  %s6 = scalar_select 0, %s5, %s3
  $region1: #{tpu_custom_call.1} parent=0
    #allocation2 [shape = 'u8[16384]{0}', space=vmem, size = 0x4000, scoped, tag = 'input window, operand 0, single buffered']
    #allocation3 [shape = 's32[1]{0}', space=sflag, size = 0x4, scoped, tag = 'scoped memory for tpu_custom_call.1']
    #allocation4 [shape = 's32[1]{0}', space=sflag, size = 0x4, scoped, tag = 'scoped memory for tpu_custom_call.1']
    #allocation5 [shape = 'u8[16384]{0}', space=vmem, size = 0x4000, scoped, tag = 'input window, operand 1, single buffered']
    #allocation6 [shape = 's32[1]{0}', space=sflag, size = 0x4, scoped, tag = 'scoped memory for tpu_custom_call.1']
    #allocation7 [shape = 'u8[16384]{0}', space=vmem, size = 0x4000, scoped, tag = 'output window, operand 0, single buffered']
    %7 = vsyncpa [#allocation3], 0
    %8 = vsyncpa [#allocation6], 0
    %9 = vsyncpa [#allocation4], 0
    // Predicated region
    $region2: #{tpu_custom_call.1} parent=1 // pred_check
      _
    $region3: #{tpu_custom_call.1} parent=1 // pred_check_branch
      %11 = sbr.rel (0) target = $region5
    $region4: #{tpu_custom_call.1} parent=1 // pred_region
      %s13 = ssub.s32 512, 512
      %14 = vsyncadd [#allocation3], %s13
      %s15 = sshll.u32 [#allocation2], 4
      %s16 = int_to_ptr.vmem [resolvable:$true] %s15
      %21 = dma.hbm_to_vmem [thread:$0]  %s0, 512, %s16, [#allocation3], 128, 128, 8
    $region5: #{tpu_custom_call.1} parent=1 // pred_fallthru
      _
    // Predicated region
    $region6: #{tpu_custom_call.1} parent=1 // pred_check
      _
    $region7: #{tpu_custom_call.1} parent=1 // pred_check_branch
      %23 = sbr.rel (0) target = $region9
    $region8: #{tpu_custom_call.1} parent=1 // pred_region
      %s25 = ssub.s32 512, 512
      %26 = vsyncadd [#allocation6], %s25
      %s27 = sshll.u32 [#allocation5], 4
      %s28 = int_to_ptr.vmem [resolvable:$true] %s27
      %33 = dma.hbm_to_vmem [thread:$0]  %s1, 512, %s28, [#allocation6], 128, 128, 8
    $region9: #{tpu_custom_call.1} parent=1 // pred_fallthru
      _
    // Predicated region
    $region10: #{tpu_custom_call.1} parent=1 // pred_check
      _
    $region11: #{tpu_custom_call.1} parent=1 // pred_check_branch
      %35 = sbr.rel (0) target = $region13
    $region12: #{tpu_custom_call.1} parent=1 // pred_region
      %36 = dma.done [#allocation3], 512
    $region13: #{tpu_custom_call.1} parent=1 // pred_fallthru
      _
    // Predicated region
    $region14: #{tpu_custom_call.1} parent=1 // pred_check
      _
    $region15: #{tpu_custom_call.1} parent=1 // pred_check_branch
      %38 = sbr.rel (0) target = $region17
    $region16: #{tpu_custom_call.1} parent=1 // pred_region
      %39 = dma.done [#allocation6], 512
    $region17: #{tpu_custom_call.1} parent=1 // pred_fallthru
      _
    %v40 = vld [vmem:[#allocation5] sm:$0xff]
    %v41 = vld [vmem:[#allocation5 + $0x8] sm:$0xff]
    %v42 = vld [vmem:[#allocation5 + $0x10] sm:$0xff]
    %v43 = vld [vmem:[#allocation5 + $0x18] sm:$0xff]
    %v44 = vld [vmem:[#allocation2] sm:$0xff]
    %v45 = vld [vmem:[#allocation2 + $0x8] sm:$0xff]
    %v46 = vld [vmem:[#allocation2 + $0x10] sm:$0xff]
    %v47 = vld [vmem:[#allocation2 + $0x18] sm:$0xff]
    %vm48 = vcmask 261120
    %v50 = vsel %vm48, %v40, 0
    %v53 = vsel %vm48, %v41, 0
    %v56 = vsel %vm48, %v42, 0
    %v59 = vsel %vm48, %v43, 0
    %61 = vmatprep.subr.mxu0 0.0
    %62 = vmatpush1.msra.mxu0 %v44
    %63 = vmatprep.subr.mxu0 0.0
    %64 = vmatpush1.msra.mxu0 %v45
    %65 = vmatprep.subr.mxu0 0.0
    %66 = vmatpush1.msra.mxu0 %v46
    %67 = vmatprep.subr.mxu0 0.0
    %68 = vmatpush1.msra.mxu0 %v47
    %69 = vmatprep.subr.mxu0 0.0
    %70 = vmatpush1.msra.mxu0 0.0
    %71 = vmatprep.subr.mxu0 0.0
    %72 = vmatpush1.msra.mxu0 0.0
    %73 = vmatprep.subr.mxu0 0.0
    %74 = vmatpush1.msra.mxu0 0.0
    %75 = vmatprep.subr.mxu0 0.0
    %76 = vmatpush1.msra.mxu0 0.0
    %77 = vmatprep.subr.mxu0 0.0
    %78 = vmatpush1.msra.mxu0 0.0
    %79 = vmatprep.subr.mxu0 0.0
    %80 = vmatpush1.msra.mxu0 0.0
    %81 = vmatprep.subr.mxu0 0.0
    %82 = vmatpush1.msra.mxu0 0.0
    %83 = vmatprep.subr.mxu0 0.0
    %84 = vmatpush1.msra.mxu0 0.0
    %85 = vmatprep.subr.mxu0 0.0
    %86 = vmatpush1.msra.mxu0 0.0
    %87 = vmatprep.subr.mxu0 0.0
    %88 = vmatpush1.msra.mxu0 0.0
    %89 = vmatprep.subr.mxu0 0.0
    %90 = vmatpush1.msra.mxu0 0.0
    %91 = vmatprep.subr.mxu0 0.0
    %92 = vmatpush1.msra.mxu0 0.0
    %93 = vmatprep.subr.mxu0 0.0
    %94 = vmatpush1.msra.mxu0 0.0
    %95 = vmatprep.subr.mxu0 0.0
    %96 = vmatpush1.msra.mxu0 0.0
    %97 = vmatprep.subr.mxu0 0.0
    %98 = vmatpush1.msra.mxu0 0.0
    %99 = vmatprep.subr.mxu0 0.0
    %100 = vmatpush1.msra.mxu0 0.0
    %101 = vmatprep.subr.mxu0 0.0
    %102 = vmatpush1.msra.mxu0 0.0
    %103 = vmatprep.subr.mxu0 0.0
    %104 = vmatpush1.msra.mxu0 0.0
    %105 = vmatprep.subr.mxu0 0.0
    %106 = vmatpush1.msra.mxu0 0.0
    %107 = vmatprep.subr.mxu0 0.0
    %108 = vmatpush1.msra.mxu0 0.0
    %109 = vmatprep.subr.mxu0 0.0
    %110 = vmatpush1.msra.mxu0 0.0
    %111 = vmatprep.subr.mxu0 0.0
    %112 = vmatpush1.msra.mxu0 0.0
    %113 = vmatprep.subr.mxu0 0.0
    %114 = vmatpush1.msra.mxu0 0.0
    %115 = vmatprep.subr.mxu0 0.0
    %116 = vmatpush1.msra.mxu0 0.0
    %117 = vmatprep.subr.mxu0 0.0
    %118 = vmatpush1.msra.mxu0 0.0
    %119 = vmatprep.subr.mxu0 0.0
    %120 = vmatpush1.msra.mxu0 0.0
    %121 = vmatprep.subr.mxu0 0.0
    %122 = vmatpush1.msra.mxu0 0.0
    %123 = vmatprep.subr.mxu0 0.0
    %124 = vmatpush1.msra.mxu0 0.0
    %125 = vmatprep.mubr.f32.mxu0 0.0
    %126 = vmatmul.mubr.f32.gmra.mrb[0].mxu0 %v50
    %v127 = vpop.f32.mrb[0].mxu0
    %v128 = vadd.f32 0.0, %v127
    %v129 = vpop.f32.mrb[0].mxu0
    %130 = vmatprep.mubr.f32.mxu0 0.0
    %131 = vmatmul.mubr.f32.gmra.mrb[0].mxu0 %v53
    %v132 = vpop.f32.mrb[0].mxu0
    %v133 = vadd.f32 0.0, %v132
    %v134 = vpop.f32.mrb[0].mxu0
    %135 = vmatprep.mubr.f32.mxu0 0.0
    %136 = vmatmul.mubr.f32.gmra.mrb[0].mxu0 %v56
    %v137 = vpop.f32.mrb[0].mxu0
    %v138 = vadd.f32 0.0, %v137
    %v139 = vpop.f32.mrb[0].mxu0
    %140 = vmatprep.mubr.f32.mxu0 0.0
    %141 = vmatmul.mubr.f32.gmra.mrb[0].mxu0 %v59
    %v142 = vpop.f32.mrb[0].mxu0
    %v143 = vadd.f32 0.0, %v142
    %v144 = vpop.f32.mrb[0].mxu0
    %145 = vdwg.mxu0
    %146 = vst [vmem:[#allocation7] sm:$0xff] %v128
    %147 = vst [vmem:[#allocation7 + $0x8] sm:$0xff] %v133
    %148 = vst [vmem:[#allocation7 + $0x10] sm:$0xff] %v138
    %149 = vst [vmem:[#allocation7 + $0x18] sm:$0xff] %v143
    // Predicated region
    $region18: #{tpu_custom_call.1} parent=1 // pred_check
      _
    $region19: #{tpu_custom_call.1} parent=1 // pred_check_branch
      %151 = sbr.rel (0) target = $region21
    $region20: #{tpu_custom_call.1} parent=1 // pred_region
      %s153 = ssub.s32 512, 512
      %154 = vsyncadd [#allocation4], %s153
      %s155 = sshll.u32 [#allocation7], 4
      %s156 = int_to_ptr.vmem [resolvable:$true] %s155
      %161 = dma.vmem_to_hbm [thread:$0]  %s156, 512, %s2, [#allocation4], 128, 128, 8
    $region21: #{tpu_custom_call.1} parent=1 // pred_fallthru
      _
    // Predicated region
    $region22: #{tpu_custom_call.1} parent=1 // pred_check
      _
    $region23: #{tpu_custom_call.1} parent=1 // pred_check_branch
      %163 = sbr.rel (0) target = $region25
    $region24: #{tpu_custom_call.1} parent=1 // pred_region
      %164 = dma.done [#allocation4], 512
    $region25: #{tpu_custom_call.1} parent=1 // pred_fallthru
      _
    %165 = vsyncpa [#allocation3], 1
    %166 = vsyncpa [#allocation6], 1
    %167 = vsyncpa [#allocation4], 1

</llo_original>
